<compile_context>
chip_gen: v7x
topology: tpu7x:2x2x1
jax: 0.10.0
libtpu: 0.0.40
codegen_flags: <defaults>
</compile_context>

<pallas_src>
import functools

import jax
import jax.numpy as jnp
from jax.experimental import pallas as pl
from jax.experimental.pallas import tpu as pltpu


def _round_up(x, m):
    return (x + m - 1) // m * m


def _sigmoid(x):
    # Exact identity; keeps the op on the EUP (tanh) instead of exp + VPU div.
    return 0.5 * (jnp.tanh(0.5 * x) + 1.0)


def _lstm_fc_kernel(input_dim, x_ref, w_ref, b_ref, fc_w_ref, fc_b_ref,
                    out_ref, act_ref):
    """Grid = (batch_tile i, layer l).

    x_ref:    (TB, input_dim) f32   raw input tile (only read at l == 0)
    w_ref:    (1, P, 3P)      bf16  layer-l input weights, gate order [i, g, o]
    b_ref:    (1, 1, 3P)      f32   layer-l bias (b_ih + b_hh), same gate order
    fc_w_ref: (P, OP)         bf16  fc weight (rows >= H are zero)
    fc_b_ref: (1, OP)         f32   fc bias
    out_ref:  (TB, OP)        f32   written only at the last layer
    act_ref:  (TB, P)         f32   activation carried across the layer axis

    Padded lanes [H, P) of the activation stay exactly 0:
    gates_pad = 0 -> i=o=0.5, g=0 -> h_pad = 0.5 * tanh(0.5 * 0) = 0.
    """
    l = pl.program_id(1)
    last = pl.num_programs(1) - 1
    P = act_ref.shape[1]

    @pl.when(l == 0)
    def _():
        # Fused input padding: zero the 128-lane activation, drop the raw
        # input into its first input_dim lanes (masked lane store).
        act_ref[...] = jnp.zeros_like(act_ref)
        act_ref[:, :input_dim] = x_ref[...]

    # One MXU matmul per layer (bf16 operands, f32 accumulation) + f32 bias.
    gates = jnp.dot(act_ref[...].astype(jnp.bfloat16), w_ref[0],
                    preferred_element_type=jnp.float32) + b_ref[0]

    # Lane-dense, P-aligned gate slices (each a whole-vreg view).
    i_g = _sigmoid(gates[:, 0 * P:1 * P])
    g_g = jnp.tanh(gates[:, 1 * P:2 * P])
    o_g = _sigmoid(gates[:, 2 * P:3 * P])
    # seq_len == 1, zero (h0, c0): recurrent matmul and forget path are zero.
    h = o_g * jnp.tanh(i_g * g_g)
    act_ref[...] = h

    @pl.when(l == last)
    def _():
        out = jnp.dot(h.astype(jnp.bfloat16), fc_w_ref[...],
                      preferred_element_type=jnp.float32) + fc_b_ref[...]
        out_ref[...] = out.astype(out_ref.dtype)


def init_params(key, input_dim, hidden_dim, layer_dim, output_dim):
    """PyTorch-like init (uniform(-1/sqrt(H), 1/sqrt(H))), weights pre-transposed.

    W_hh is NOT generated: with seq_len=1 and zero initial hidden state it is
    never used by the forward pass.
    """
    H = hidden_dim
    bound = 1.0 / float(H) ** 0.5
    params = {"w_ih": [], "b_ih": [], "b_hh": []}
    k = key
    for l in range(layer_dim):
        in_d = input_dim if l == 0 else H
        k, k1, k2, k3 = jax.random.split(k, 4)
        # (in_features, 4H), PyTorch gate order [i, f, g, o] along the 4H axis.
        params["w_ih"].append(
            jax.random.uniform(k1, (in_d, 4 * H), jnp.float32, -bound, bound))
        params["b_ih"].append(
            jax.random.uniform(k2, (4 * H,), jnp.float32, -bound, bound))
        params["b_hh"].append(
            jax.random.uniform(k3, (4 * H,), jnp.float32, -bound, bound))
    k, k1, k2 = jax.random.split(k, 3)
    params["fc_w"] = jax.random.uniform(k1, (H, output_dim), jnp.float32, -bound, bound)
    params["fc_b"] = jax.random.uniform(k2, (output_dim,), jnp.float32, -bound, bound)
    return params


def pack_params(params, input_dim, hidden_dim, layer_dim, output_dim):
    """Pack into the kernel layout.

    w_lstm: (L, P, 3P) bf16 — W_ih gate slices [i, g, o], each padded to P lanes.
    b_lstm: (L, 1, 3P) f32  — b_ih + b_hh in the same gate layout (kept f32).
    fc_w:   (P, OP)    bf16 — fc weight, rows >= H zero.
    fc_b:   (1, OP)    f32  — fc bias.
    """
    H = hidden_dim
    P = _round_up(max(input_dim, H), 128)
    OP = _round_up(output_dim, 128)

    w_lstm = jnp.zeros((layer_dim, P, 3 * P), jnp.float32)
    b_lstm = jnp.zeros((layer_dim, 1, 3 * P), jnp.float32)
    for l in range(layer_dim):
        in_d = input_dim if l == 0 else H
        w = params["w_ih"][l]                         # (in_d, 4H)
        b = params["b_ih"][l] + params["b_hh"][l]     # (4H,)
        for k, gate in enumerate((0, 2, 3)):          # keep i, g, o; drop dead f
            w_lstm = w_lstm.at[l, :in_d, k * P:k * P + H].set(
                w[:, gate * H:(gate + 1) * H])
            b_lstm = b_lstm.at[l, 0, k * P:k * P + H].set(
                b[gate * H:(gate + 1) * H])

    fc_w = jnp.zeros((P, OP), jnp.float32)
    fc_w = fc_w.at[:H, :output_dim].set(params["fc_w"])
    fc_b = jnp.zeros((1, OP), jnp.float32)
    fc_b = fc_b.at[0, :output_dim].set(params["fc_b"])
    return (w_lstm.astype(jnp.bfloat16), b_lstm,
            fc_w.astype(jnp.bfloat16), fc_b)


def lstm_model_forward(x, w_lstm, b_lstm, fc_w, fc_b, input_dim, hidden_dim,
                       layer_dim, output_dim, batch_tile=None):
    B = x.shape[0]
    L, P, P3 = w_lstm.shape
    OP = fc_w.shape[1]

    if batch_tile is None:
        # Aim for >= 2 batch tiles on real batches (shards across both TCs on
        # v7x) while keeping sublane alignment; cap at 256 (MXU tile height).
        batch_tile = min(256, max(8, _round_up(pl.cdiv(B, 2), 8)))
    TB = batch_tile
    n_btiles = pl.cdiv(B, TB)

    # Explicit VMEM budget: double-buffered streamed blocks + resident scratch
    # + generous slack for in-kernel intermediates.
    vmem_bytes = (2 * (TB * input_dim * 4 + P * P3 * 2 + P3 * 4
                       + P * OP * 2 + OP * 4 + TB * OP * 4)
                  + TB * P * 4)
    vmem_limit = int(min(max(2 * vmem_bytes + (4 << 20), 16 << 20), 100 << 20))

    kernel = functools.partial(_lstm_fc_kernel, input_dim)
    out = pl.pallas_call(
        kernel,
        grid=(n_btiles, layer_dim),
        in_specs=[
            pl.BlockSpec((TB, input_dim), lambda i, l: (i, 0)),   # raw x tile
            pl.BlockSpec((1, P, P3), lambda i, l: (l, 0, 0)),     # layer weights (bf16, streamed)
            pl.BlockSpec((1, 1, P3), lambda i, l: (l, 0, 0)),     # layer bias (f32, streamed)
            pl.BlockSpec((P, OP), lambda i, l: (0, 0)),           # fc weight (bf16, fetched once)
            pl.BlockSpec((1, OP), lambda i, l: (0, 0)),           # fc bias (f32, fetched once)
        ],
        out_specs=pl.BlockSpec((TB, OP), lambda i, l: (i, 0)),
        out_shape=jax.ShapeDtypeStruct((B, OP), jnp.float32),
        scratch_shapes=[pltpu.VMEM((TB, P), jnp.float32)],        # carried activation
        compiler_params=pltpu.CompilerParams(
            dimension_semantics=("parallel", "arbitrary"),
            vmem_limit_bytes=vmem_limit),
    )(x.astype(jnp.float32), w_lstm, b_lstm, fc_w, fc_b)
    # Lane-dense kernel output; only the first output_dim lanes are real.
    return out[:, :output_dim]


def reference_forward(x, params, hidden_dim, layer_dim):
    """Pure-JAX f32 reference of the PyTorch forward (seq_len=1, zero h0/c0)."""
    H = hidden_dim
    inp = x
    for l in range(layer_dim):
        gates = inp @ params["w_ih"][l] + params["b_ih"][l] + params["b_hh"][l]
        i = jax.nn.sigmoid(gates[:, 0 * H:1 * H])
        g = jnp.tanh(gates[:, 2 * H:3 * H])
        o = jax.nn.sigmoid(gates[:, 3 * H:4 * H])
        inp = o * jnp.tanh(i * g)   # f * c0 == 0
    return inp @ params["fc_w"] + params["fc_b"]


if __name__ == "__main__":
    input_dim, hidden_dim, layer_dim, output_dim = 16, 32, 2, 8
    batch = 2

    key = jax.random.PRNGKey(0)
    kx, kp = jax.random.split(key)
    x = jax.random.normal(kx, (batch, input_dim), jnp.float32)
    params = init_params(kp, input_dim, hidden_dim, layer_dim, output_dim)
    w_lstm, b_lstm, fc_w, fc_b = pack_params(
        params, input_dim, hidden_dim, layer_dim, output_dim)

    out = lstm_model_forward(x, w_lstm, b_lstm, fc_w, fc_b, input_dim,
                             hidden_dim, layer_dim, output_dim)
    out = jax.block_until_ready(out)

    ref = reference_forward(x, params, hidden_dim, layer_dim)
    assert out.shape == (batch, output_dim), out.shape
    # bf16 matmul operands (f32 accumulation, f32 biases) vs f32 reference.
    err = float(jnp.max(jnp.abs(out - ref)))
    assert err < 2e-2, err
    print("KERNEL_OK")
</pallas_src>

<mosaic_0001>
module attributes {stable_mosaic.version = 11 : i64} {
  func.func @_lstm_fc_kernel(%arg0: i32, %arg1: i32, %arg2: memref<8x16xf32, #tpu.memory_space<vmem>>, %arg3: memref<1x128x384xbf16, #tpu.memory_space<vmem>>, %arg4: memref<1x1x384xf32, #tpu.memory_space<vmem>>, %arg5: memref<128x128xbf16, #tpu.memory_space<vmem>>, %arg6: memref<1x128xf32, #tpu.memory_space<vmem>>, %arg7: memref<8x128xf32, #tpu.memory_space<vmem>>, %arg8: memref<8x128xf32, #tpu.memory_space<vmem>>) attributes {dimension_semantics = [#tpu.dimension_semantics<parallel>, #tpu.dimension_semantics<arbitrary>], iteration_bounds = array<i64: 1, 2>, scalar_prefetch = 0 : i64, scratch_operands = 1 : i64, tpu.core_type = #tpu.core_type<tc>, window_params = [{transform_indices = @transform_0, window_bounds = array<i64: 8, 16>}, {transform_indices = @transform_1, window_bounds = array<i64: 1, 128, 384>}, {transform_indices = @transform_2, window_bounds = array<i64: 1, 1, 384>}, {pipeline_mode = #tpu.pipeline_mode<synchronous>, transform_indices = @transform_3, window_bounds = array<i64: 128, 128>}, {pipeline_mode = #tpu.pipeline_mode<synchronous>, transform_indices = @transform_4, window_bounds = array<i64: 1, 128>}, {transform_indices = @transform_5, window_bounds = array<i64: 8, 128>}]} {
    %c0_i32 = arith.constant 0 : i32
    %0 = arith.cmpi eq, %arg1, %c0_i32 : i32
    %1 = arith.extui %0 : i1 to i32
    %c0_i32_0 = arith.constant 0 : i32
    %2 = arith.cmpi ne, %1, %c0_i32_0 : i32
    scf.if %2 {
      %cst_17 = arith.constant 0.000000e+00 : f32
      %37 = vector.broadcast %cst_17 : f32 to vector<8x128xf32>
      %c0_18 = arith.constant 0 : index
      %c0_19 = arith.constant 0 : index
      %38 = vector.load %arg8[%c0_18, %c0_19] : memref<8x128xf32, #tpu.memory_space<vmem>>, vector<8x128xf32>
      tpu.vector_store %arg8[%c0_18, %c0_19], %37 {strides = array<i32>} : memref<8x128xf32, #tpu.memory_space<vmem>>, vector<8x128xf32>,
      %c0_20 = arith.constant 0 : index
      %c0_21 = arith.constant 0 : index
      %39 = vector.load %arg2[%c0_20, %c0_21] : memref<8x16xf32, #tpu.memory_space<vmem>>, vector<8x16xf32>
      %c0_22 = arith.constant 0 : index
      %c0_23 = arith.constant 0 : index
      %40 = vector.load %arg8[%c0_22, %c0_23] : memref<8x128xf32, #tpu.memory_space<vmem>>, vector<8x16xf32>
      tpu.vector_store %arg8[%c0_22, %c0_23], %39 {strides = array<i32>} : memref<8x128xf32, #tpu.memory_space<vmem>>, vector<8x16xf32>,
    } else {
    }
    %c0 = arith.constant 0 : index
    %c0_1 = arith.constant 0 : index
    %3 = vector.load %arg8[%c0, %c0_1] : memref<8x128xf32, #tpu.memory_space<vmem>>, vector<8x128xf32>
    %4 = arith.truncf %3 : vector<8x128xf32> to vector<8x128xbf16>
    %c0_2 = arith.constant 0 : index
    %c0_3 = arith.constant 0 : index
    %c0_4 = arith.constant 0 : index
    %5 = vector.load %arg3[%c0_2, %c0_3, %c0_4] : memref<1x128x384xbf16, #tpu.memory_space<vmem>>, vector<1x128x384xbf16>
    %6 = vector.shape_cast %5 : vector<1x128x384xbf16> to vector<128x384xbf16>
    %cst = arith.constant dense<0.000000e+00> : vector<8x384xf32>
    %7 = tpu.matmul %4, %6, %cst {dimension_numbers = #tpu.dot_dimension_numbers<[1], [0], [0], [1], [0, 0, 1, 1], [], []>} : vector<8x128xbf16>, vector<128x384xbf16>, vector<8x384xf32> -> vector<8x384xf32>
    %c0_5 = arith.constant 0 : index
    %c0_6 = arith.constant 0 : index
    %c0_7 = arith.constant 0 : index
    %8 = vector.load %arg4[%c0_5, %c0_6, %c0_7] : memref<1x1x384xf32, #tpu.memory_space<vmem>>, vector<1x1x384xf32>
    %9 = vector.shape_cast %8 : vector<1x1x384xf32> to vector<1x384xf32>
    %10 = vector.broadcast %9 : vector<1x384xf32> to vector<8x384xf32>
    %11 = arith.addf %7, %10 : vector<8x384xf32>
    %12 = vector.extract_strided_slice %11 {offsets = [0, 0], sizes = [8, 128], strides = [1, 1]} : vector<8x384xf32> to vector<8x128xf32>
    %cst_8 = arith.constant 5.000000e-01 : f32
    %13 = vector.broadcast %cst_8 : f32 to vector<8x128xf32>
    %14 = arith.mulf %13, %12 : vector<8x128xf32>
    %15 = math.tanh %14 : vector<8x128xf32>
    %cst_9 = arith.constant 1.000000e+00 : f32
    %16 = vector.broadcast %cst_9 : f32 to vector<8x128xf32>
    %17 = arith.addf %15, %16 : vector<8x128xf32>
    %cst_10 = arith.constant 5.000000e-01 : f32
    %18 = vector.broadcast %cst_10 : f32 to vector<8x128xf32>
    %19 = arith.mulf %18, %17 : vector<8x128xf32>
    %20 = vector.extract_strided_slice %11 {offsets = [0, 128], sizes = [8, 128], strides = [1, 1]} : vector<8x384xf32> to vector<8x128xf32>
    %21 = math.tanh %20 : vector<8x128xf32>
    %22 = vector.extract_strided_slice %11 {offsets = [0, 256], sizes = [8, 128], strides = [1, 1]} : vector<8x384xf32> to vector<8x128xf32>
    %cst_11 = arith.constant 5.000000e-01 : f32
    %23 = vector.broadcast %cst_11 : f32 to vector<8x128xf32>
    %24 = arith.mulf %23, %22 : vector<8x128xf32>
    %25 = math.tanh %24 : vector<8x128xf32>
    %cst_12 = arith.constant 1.000000e+00 : f32
    %26 = vector.broadcast %cst_12 : f32 to vector<8x128xf32>
    %27 = arith.addf %25, %26 : vector<8x128xf32>
    %cst_13 = arith.constant 5.000000e-01 : f32
    %28 = vector.broadcast %cst_13 : f32 to vector<8x128xf32>
    %29 = arith.mulf %28, %27 : vector<8x128xf32>
    %30 = arith.mulf %19, %21 : vector<8x128xf32>
    %31 = math.tanh %30 : vector<8x128xf32>
    %32 = arith.mulf %29, %31 : vector<8x128xf32>
    %c0_14 = arith.constant 0 : index
    %c0_15 = arith.constant 0 : index
    %33 = vector.load %arg8[%c0_14, %c0_15] : memref<8x128xf32, #tpu.memory_space<vmem>>, vector<8x128xf32>
    tpu.vector_store %arg8[%c0_14, %c0_15], %32 {strides = array<i32>} : memref<8x128xf32, #tpu.memory_space<vmem>>, vector<8x128xf32>,
    %c1_i32 = arith.constant 1 : i32
    %34 = arith.cmpi eq, %arg1, %c1_i32 : i32
    %35 = arith.extui %34 : i1 to i32
    %c0_i32_16 = arith.constant 0 : i32
    %36 = arith.cmpi ne, %35, %c0_i32_16 : i32
    scf.if %36 {
      %37 = arith.truncf %32 : vector<8x128xf32> to vector<8x128xbf16>
      %c0_17 = arith.constant 0 : index
      %c0_18 = arith.constant 0 : index
      %38 = vector.load %arg5[%c0_17, %c0_18] : memref<128x128xbf16, #tpu.memory_space<vmem>>, vector<128x128xbf16>
      %cst_19 = arith.constant dense<0.000000e+00> : vector<8x128xf32>
      %39 = tpu.matmul %37, %38, %cst_19 {dimension_numbers = #tpu.dot_dimension_numbers<[1], [0], [0], [1], [0, 0, 1, 1], [], []>} : vector<8x128xbf16>, vector<128x128xbf16>, vector<8x128xf32> -> vector<8x128xf32>
      %c0_20 = arith.constant 0 : index
      %c0_21 = arith.constant 0 : index
      %40 = vector.load %arg6[%c0_20, %c0_21] : memref<1x128xf32, #tpu.memory_space<vmem>>, vector<1x128xf32>
      %41 = vector.broadcast %40 : vector<1x128xf32> to vector<8x128xf32>
      %42 = arith.addf %39, %41 : vector<8x128xf32>
      %c0_22 = arith.constant 0 : index
      %c0_23 = arith.constant 0 : index
      %43 = vector.load %arg7[%c0_22, %c0_23] : memref<8x128xf32, #tpu.memory_space<vmem>>, vector<8x128xf32>
      tpu.vector_store %arg7[%c0_22, %c0_23], %42 {strides = array<i32>} : memref<8x128xf32, #tpu.memory_space<vmem>>, vector<8x128xf32>,
    } else {
    }
    return
  }
  func.func @transform_0(%arg0: i32, %arg1: i32) -> (i32, i32) {
    %c0_i32 = arith.constant 0 : i32
    %c0_i32_0 = arith.constant 0 : i32
    return %arg0, %c0_i32 : i32, i32
  }
  func.func @transform_1(%arg0: i32, %arg1: i32) -> (i32, i32, i32) {
    %c0_i32 = arith.constant 0 : i32
    %c0_i32_0 = arith.constant 0 : i32
    %c0_i32_1 = arith.constant 0 : i32
    return %arg1, %c0_i32, %c0_i32_0 : i32, i32, i32
  }
  func.func @transform_2(%arg0: i32, %arg1: i32) -> (i32, i32, i32) {
    %c0_i32 = arith.constant 0 : i32
    %c0_i32_0 = arith.constant 0 : i32
    %c0_i32_1 = arith.constant 0 : i32
    return %arg1, %c0_i32, %c0_i32_0 : i32, i32, i32
  }
  func.func @transform_3(%arg0: i32, %arg1: i32) -> (i32, i32) {
    %c0_i32 = arith.constant 0 : i32
    %c0_i32_0 = arith.constant 0 : i32
    %c0_i32_1 = arith.constant 0 : i32
    return %c0_i32, %c0_i32_0 : i32, i32
  }
  func.func @transform_4(%arg0: i32, %arg1: i32) -> (i32, i32) {
    %c0_i32 = arith.constant 0 : i32
    %c0_i32_0 = arith.constant 0 : i32
    %c0_i32_1 = arith.constant 0 : i32
    return %c0_i32, %c0_i32_0 : i32, i32
  }
  func.func @transform_5(%arg0: i32, %arg1: i32) -> (i32, i32) {
    %c0_i32 = arith.constant 0 : i32
    %c0_i32_0 = arith.constant 0 : i32
    return %arg0, %c0_i32 : i32, i32
  }
}

</mosaic_0001>

<llo_original>
// kernel: tpu_custom_call.1
$region0: #{tpu_custom_call.1}
  #allocation0 [shape = 'u32[]', space=smem, size = 0x4, offset = 0x4, fixed_abs, tag = 'smem constant byte address 0x4 - core index']
  #allocation1 [shape = 'u32[144,128]{1,0:T(1,128)}', space=vmem, size = 0x12000, scoped, tag = 'internal scratch']
  #allocation2 [shape = 'f32[8,128]{1,0:T(8,128)}', space=vmem, size = 0x1000, scoped, tag = 'scratch operand']
  %s0 = inlined_call_operand.hbm [shape: f32[2,16], index: 0, kind: input, shape index: {}]
  %s1 = inlined_call_operand.hbm [shape: bf16[2,128,384], index: 1, kind: input, shape index: {}]
  %s2 = inlined_call_operand.vmem [shape: f32[2,1,384], index: 2, kind: input, shape index: {}]
  %s3 = inlined_call_operand.hbm [shape: bf16[128,128], index: 3, kind: input, shape index: {}]
  %s4 = inlined_call_operand.vmem [shape: f32[1,128], index: 4, kind: input, shape index: {}]
  %s5 = inlined_call_operand.hbm [shape: f32[2,128], index: 5, kind: output, shape index: {}]
  %s6 = sld [smem:[#allocation0]]
  $region73: #{tpu_custom_call.1} parent=0
    _
  %s8 = ssub.s32 1, %s6
  %s9 = scalar_select 0, %s8, %s6
  $region1: #{tpu_custom_call.1} parent=0
    #allocation3 [shape = 'u8[4096]{0}', space=vmem, size = 0x1000, scoped, tag = 'input window, operand 0, single buffered']
    #allocation4 [shape = 's32[2]{0}', space=sflag, size = 0x8, scoped, tag = 'scoped memory for tpu_custom_call.1']
    #allocation5 [shape = 's32[2]{0}', space=sflag, size = 0x8, scoped, tag = 'scoped memory for tpu_custom_call.1']
    #allocation6 [shape = 'u8[196608]{0}', space=vmem, size = 0x30000, scoped, tag = 'input window, operand 1']
    #allocation7 [shape = 's32[2]{0}', space=sflag, size = 0x8, scoped, tag = 'scoped memory for tpu_custom_call.1']
    #allocation8 [shape = 'u8[32768]{0}', space=vmem, size = 0x8000, scoped, tag = 'input window, operand 3, single buffered']
    #allocation9 [shape = 'u8[4096]{0}', space=vmem, size = 0x1000, scoped, tag = 'output window, operand 0, single buffered']
    %10 = vsyncpa [#allocation4], 0
    %11 = vsyncpa [#allocation7], 0
    %s12 = scalar_lea.sflag [#allocation7], 1
    %13 = vsyncpa %s12, 0
    %14 = vsyncpa [#allocation5], 0
    loop: start=0, step=1, limit=4
    $region2: #{tpu_custom_call.1} parent=1 // loop_pre_header
      _
    $region3: #{tpu_custom_call.1} parent=1 // loop_header
      %s16 = sphi 0, %s20
      %p17 = scmp.ge.s32.totalorder %s16, 4
      %s23 = sphi 0, %s35
      %s24 = sphi 0, %s31
      %s25 = sphi 0, %s23
      %s26 = sphi 0, %s24
      %s27 = sphi 0, %s25
      %s28 = sphi 0, %s26
      %s38 = sphi 0, %s40
      %s41 = sphi 0, %s38
      %s42 = sphi 0, %s41
      %s58 = sphi 0, %s42
      %s64 = sphi 0, %s66
      %s67 = sphi 0, %s64
      %s68 = sphi 0, %s67
      %s84 = sphi 0, %s68
      %s90 = sphi 0, %s92
      %s93 = sphi 0, %s90
      %s94 = sphi 0, %s93
      %s110 = sphi 0, %s94
      %s114 = sphi 0, %s114
      %s116 = sphi 0, %s114
      %s117 = sphi 0, %s116
      %s131 = sphi 0, %s117
      %s135 = sphi 0, %s135
      %s137 = sphi 0, %s135
      %s138 = sphi 0, %s137
      %s152 = sphi 0, %s138
      %s158 = sphi 0, %s160
      %s161 = sphi 0, %s158
      %s162 = sphi 0, %s161
      %s178 = sphi 0, %s162
    $region4: #{tpu_custom_call.1} parent=1 // loop_header_branch
      %19 = sbr.rel (%p17) target = $region8
    $region5: #{tpu_custom_call.1} parent=1 // loop_body
      %s21 = ssub.s32 %s16, 1
      %s22 = ssub.s32 %s16, 2
      %s29 = sadd.s32 1, %s24
      %p30 = scmp.ge.s32.totalorder %s29, 2
      %s31 = scalar_select %p30, 0, %s29
      %s32 = sadd.s32 1, %s23
      %s33 = scalar_select %p30, %s32, %s23
      %p34 = scmp.ge.s32.totalorder %s33, 1
      %s35 = scalar_select %p34, 0, %s33
      %s36 = ssub.s32 %s23, %s35
      %p37 = scmp.eq.s32.totalorder %s36, 0
      %s39 = sadd.s32 %s38, 1
      %s40 = scalar_select %p37, %s38, %s39
      %p43 = pneg %p37
      %p44 = scmp.eq.s32.totalorder %s16, 1
      %p45 = por %p43, %p44
      %p46 = scmp.ne.s32.totalorder %s38, %s41
      %p47 = scmp.eq.s32.totalorder %s16, 0
      %p48 = por %p46, %p47
      %p49 = scmp.ne.s32.totalorder %s38, %s41
      %p50 = scmp.eq.s32.totalorder %s21, 1
      %p51 = por %p49, %p50
      %p52 = scmp.ne.s32.totalorder %s41, %s42
      %p53 = scmp.eq.s32.totalorder %s21, 0
      %p54 = por %p52, %p53
      %p55 = scmp.ne.s32.totalorder %s41, %s42
      %p56 = scmp.eq.s32.totalorder %s22, 1
      %p57 = por %p55, %p56
      %p59 = scmp.ne.s32.totalorder %s42, %s58
      %p60 = scmp.eq.s32.totalorder %s22, 0
      %p61 = por %p59, %p60
      %s62 = ssub.s32 %s24, %s31
      %p63 = scmp.eq.s32.totalorder %s62, 0
      %s65 = sadd.s32 %s64, 1
      %s66 = scalar_select %p63, %s64, %s65
      %p69 = pneg %p63
      %p70 = scmp.eq.s32.totalorder %s16, 1
      %p71 = por %p69, %p70
      %p72 = scmp.ne.s32.totalorder %s64, %s67
      %p73 = scmp.eq.s32.totalorder %s16, 0
      %p74 = por %p72, %p73
      %p75 = scmp.ne.s32.totalorder %s64, %s67
      %p76 = scmp.eq.s32.totalorder %s21, 1
      %p77 = por %p75, %p76
      %p78 = scmp.ne.s32.totalorder %s67, %s68
      %p79 = scmp.eq.s32.totalorder %s21, 0
      %p80 = por %p78, %p79
      %p81 = scmp.ne.s32.totalorder %s67, %s68
      %p82 = scmp.eq.s32.totalorder %s22, 1
      %p83 = por %p81, %p82
      %p85 = scmp.ne.s32.totalorder %s68, %s84
      %p86 = scmp.eq.s32.totalorder %s22, 0
      %p87 = por %p85, %p86
      %s88 = ssub.s32 %s24, %s31
      %p89 = scmp.eq.s32.totalorder %s88, 0
      %s91 = sadd.s32 %s90, 1
      %s92 = scalar_select %p89, %s90, %s91
      %p95 = pneg %p89
      %p96 = scmp.eq.s32.totalorder %s16, 1
      %p97 = por %p95, %p96
      %p98 = scmp.ne.s32.totalorder %s90, %s93
      %p99 = scmp.eq.s32.totalorder %s16, 0
      %p100 = por %p98, %p99
      %p101 = scmp.ne.s32.totalorder %s90, %s93
      %p102 = scmp.eq.s32.totalorder %s21, 1
      %p103 = por %p101, %p102
      %p104 = scmp.ne.s32.totalorder %s93, %s94
      %p105 = scmp.eq.s32.totalorder %s21, 0
      %p106 = por %p104, %p105
      %p107 = scmp.ne.s32.totalorder %s93, %s94
      %p108 = scmp.eq.s32.totalorder %s22, 1
      %p109 = por %p107, %p108
      %p111 = scmp.ne.s32.totalorder %s94, %s110
      %p112 = scmp.eq.s32.totalorder %s22, 0
      %p113 = por %p111, %p112
      %s115 = sadd.s32 %s114, 1
      %p118 = scmp.eq.s32.totalorder %s16, 1
      %p119 = scmp.ne.s32.totalorder %s114, %s116
      %p120 = scmp.eq.s32.totalorder %s16, 0
      %p121 = por %p119, %p120
      %p122 = scmp.ne.s32.totalorder %s114, %s116
      %p123 = scmp.eq.s32.totalorder %s21, 1
      %p124 = por %p122, %p123
      %p125 = scmp.ne.s32.totalorder %s116, %s117
      %p126 = scmp.eq.s32.totalorder %s21, 0
      %p127 = por %p125, %p126
      %p128 = scmp.ne.s32.totalorder %s116, %s117
      %p129 = scmp.eq.s32.totalorder %s22, 1
      %p130 = por %p128, %p129
      %p132 = scmp.ne.s32.totalorder %s117, %s131
      %p133 = scmp.eq.s32.totalorder %s22, 0
      %p134 = por %p132, %p133
      %s136 = sadd.s32 %s135, 1
      %p139 = scmp.eq.s32.totalorder %s16, 1
      %p140 = scmp.ne.s32.totalorder %s135, %s137
      %p141 = scmp.eq.s32.totalorder %s16, 0
      %p142 = por %p140, %p141
      %p143 = scmp.ne.s32.totalorder %s135, %s137
      %p144 = scmp.eq.s32.totalorder %s21, 1
      %p145 = por %p143, %p144
      %p146 = scmp.ne.s32.totalorder %s137, %s138
      %p147 = scmp.eq.s32.totalorder %s21, 0
      %p148 = por %p146, %p147
      %p149 = scmp.ne.s32.totalorder %s137, %s138
      %p150 = scmp.eq.s32.totalorder %s22, 1
      %p151 = por %p149, %p150
      %p153 = scmp.ne.s32.totalorder %s138, %s152
      %p154 = scmp.eq.s32.totalorder %s22, 0
      %p155 = por %p153, %p154
      %s156 = ssub.s32 %s23, %s35
      %p157 = scmp.eq.s32.totalorder %s156, 0
      %s159 = sadd.s32 %s158, 1
      %s160 = scalar_select %p157, %s158, %s159
      %p163 = pneg %p157
      %p164 = scmp.eq.s32.totalorder %s16, 1
      %p165 = por %p163, %p164
      %p166 = scmp.ne.s32.totalorder %s158, %s161
      %p167 = scmp.eq.s32.totalorder %s16, 0
      %p168 = por %p166, %p167
      %p169 = scmp.ne.s32.totalorder %s158, %s161
      %p170 = scmp.eq.s32.totalorder %s21, 1
      %p171 = por %p169, %p170
      %p172 = scmp.ne.s32.totalorder %s161, %s162
      %p173 = scmp.eq.s32.totalorder %s21, 0
      %p174 = por %p172, %p173
      %p175 = scmp.ne.s32.totalorder %s161, %s162
      %p176 = scmp.eq.s32.totalorder %s22, 1
      %p177 = por %p175, %p176
      %p179 = scmp.ne.s32.totalorder %s162, %s178
      %p180 = scmp.eq.s32.totalorder %s22, 0
      %p181 = por %p179, %p180
      %p182 = scmp.le.s32.totalorder 1, %s16
      %p183 = scmp.lt.s32.totalorder %s16, 3
      %p184 = pnand %p182, %p183
      %p185 = pneg %p184
      // Predicated region
      $region9: #{tpu_custom_call.1} parent=5 // pred_check
        _
      $region10: #{tpu_custom_call.1} parent=5 // pred_check_branch
        %187 = sbr.rel (%p184) target = $region12
      $region11: #{tpu_custom_call.1} parent=5 // pred_region
        %s188 = ssub.s32 %s16, 1
        // Predicated region
        $region13: #{tpu_custom_call.1} parent=11 // pred_check
          %p189 = pneg %p54
        $region14: #{tpu_custom_call.1} parent=11 // pred_check_branch
          %191 = sbr.rel (%p189) target = $region16
        $region15: #{tpu_custom_call.1} parent=11 // pred_region
          %s192 = smul.u32 4, %s25
          %s193 = ssub.s32 1, %s192
          %s194 = smul.u32 32, %s193
          %s196 = ssub.s32 128, %s194
          %197 = vsyncadd [#allocation4], %s196
          %p198 = scmp.ne.s32.totalorder 0, %s194
          %s199 = smul.addr %s192, 32
          %s200 = scalar_lea.hbm %s0, %s199
          %s201 = smul.u32 2, %s193
          %s202 = sshll.u32 [#allocation3], 4
          %s203 = int_to_ptr.vmem [resolvable:$true] %s202
          %s204 = sshll.u32 %s201, 4
          %208 = dma.hbm_to_vmem [thread:$0]  (%p198), %s200, %s204, %s203, [#allocation4], 32, 32, 2
        $region16: #{tpu_custom_call.1} parent=11 // pred_fallthru
          _
        // Predicated region
        $region17: #{tpu_custom_call.1} parent=11 // pred_check
          %p209 = pneg %p127
        $region18: #{tpu_custom_call.1} parent=11 // pred_check_branch
          %211 = sbr.rel (%p209) target = $region20
        $region19: #{tpu_custom_call.1} parent=11 // pred_region
          %s213 = ssub.s32 1024, 1024
          %214 = vsyncadd [#allocation7], %s213
          %s215 = sshll.u32 [#allocation8], 4
          %s216 = int_to_ptr.vmem [resolvable:$true] %s215
          %221 = dma.hbm_to_vmem [thread:$0]  %s3, 1024, %s216, [#allocation7], 64, 64, 4
        $region20: #{tpu_custom_call.1} parent=11 // pred_fallthru
          _
        // Predicated region
        $region21: #{tpu_custom_call.1} parent=11 // pred_check
          %p222 = pneg %p148
        $region22: #{tpu_custom_call.1} parent=11 // pred_check_branch
          %224 = sbr.rel (%p222) target = $region24
        $region23: #{tpu_custom_call.1} parent=11 // pred_region
          _
        $region24: #{tpu_custom_call.1} parent=11 // pred_fallthru
          _
      $region12: #{tpu_custom_call.1} parent=5 // pred_fallthru
        _
      %p225 = scmp.lt.s32.totalorder %s16, 2
      // Predicated region
      $region25: #{tpu_custom_call.1} parent=5 // pred_check
        %p226 = pneg %p225
      $region26: #{tpu_custom_call.1} parent=5 // pred_check_branch
        %228 = sbr.rel (%p226) target = $region28
      $region27: #{tpu_custom_call.1} parent=5 // pred_region
        // Predicated region
        $region29: #{tpu_custom_call.1} parent=27 // pred_check
          %p229 = pneg %p74
        $region30: #{tpu_custom_call.1} parent=27 // pred_check_branch
          %231 = sbr.rel (%p229) target = $region32
        $region31: #{tpu_custom_call.1} parent=27 // pred_region
          %s232 = sand.u32 %s16, 1
          %s233 = scalar_lea.sflag [#allocation7], %s232
          %s234 = sand.u32 %s64, 1
          %s235 = smul.addr %s234, 192
          %s236 = scalar_lea.vmem [#allocation6], %s235
          %s238 = ssub.s32 3072, 3072
          %239 = vsyncadd %s233, %s238
          %s240 = smul.addr %s24, 48
          %s241 = smul.addr %s240, 64
          %s242 = scalar_lea.hbm %s1, %s241
          %s243 = sshll.u32 %s236, 4
          %s244 = int_to_ptr.vmem [resolvable:$true] %s243
          %249 = dma.hbm_to_vmem [thread:$0]  %s242, 3072, %s244, %s233, 192, 192, 12
        $region32: #{tpu_custom_call.1} parent=27 // pred_fallthru
          _
        // Predicated region
        $region33: #{tpu_custom_call.1} parent=27 // pred_check
          %p250 = pneg %p100
        $region34: #{tpu_custom_call.1} parent=27 // pred_check_branch
          %252 = sbr.rel (%p250) target = $region36
        $region35: #{tpu_custom_call.1} parent=27 // pred_region
          %p253 = scmp.lt.s32.totalorder %s24, 1
          %s254 = scalar_select %p253, %s24, 1
          %s255 = smul.addr %s254, 3
          %s256 = scalar_lea.vmem %s2, %s255
        $region36: #{tpu_custom_call.1} parent=27 // pred_fallthru
          _
      $region28: #{tpu_custom_call.1} parent=5 // pred_fallthru
        _
      %p257 = scmp.le.s32.totalorder 1, %s16
      %p258 = scmp.lt.s32.totalorder %s16, 3
      %p259 = pnand %p257, %p258
      %p260 = pneg %p259
      // Predicated region
      $region37: #{tpu_custom_call.1} parent=5 // pred_check
        _
      $region38: #{tpu_custom_call.1} parent=5 // pred_check_branch
        %262 = sbr.rel (%p259) target = $region40
      $region39: #{tpu_custom_call.1} parent=5 // pred_region
        %s263 = ssub.s32 %s16, 1
        // Predicated region
        $region41: #{tpu_custom_call.1} parent=39 // pred_check
          %p264 = pneg %p54
        $region42: #{tpu_custom_call.1} parent=39 // pred_check_branch
          %266 = sbr.rel (%p264) target = $region44
        $region43: #{tpu_custom_call.1} parent=39 // pred_region
          %267 = dma.done [#allocation4], 128
        $region44: #{tpu_custom_call.1} parent=39 // pred_fallthru
          _
        %s268 = sand.u32 %s21, 1
        %s269 = scalar_lea.sflag [#allocation7], %s268
        %s270 = sand.u32 %s67, 1
        %s271 = smul.addr %s270, 192
        %s272 = scalar_lea.vmem [#allocation6], %s271
        // Predicated region
        $region45: #{tpu_custom_call.1} parent=39 // pred_check
          %p273 = pneg %p80
        $region46: #{tpu_custom_call.1} parent=39 // pred_check_branch
          %275 = sbr.rel (%p273) target = $region48
        $region47: #{tpu_custom_call.1} parent=39 // pred_region
          %276 = dma.done %s269, 3072
        $region48: #{tpu_custom_call.1} parent=39 // pred_fallthru
          _
        // Predicated region
        $region49: #{tpu_custom_call.1} parent=39 // pred_check
          %p277 = pneg %p127
        $region50: #{tpu_custom_call.1} parent=39 // pred_check_branch
          %279 = sbr.rel (%p277) target = $region52
        $region51: #{tpu_custom_call.1} parent=39 // pred_region
          %280 = dma.done [#allocation7], 1024
        $region52: #{tpu_custom_call.1} parent=39 // pred_fallthru
          _
        %p281 = pneg %p54
        %p282 = pneg %p51
        %s283 = sand.u32 %s21, 1
        %s284 = scalar_lea.sflag [#allocation7], %s283
        %s285 = sand.u32 %s67, 1
        %s286 = smul.addr %s285, 192
        %s287 = scalar_lea.vmem [#allocation6], %s286
        %p288 = pneg %p80
        %p289 = pneg %p77
        %p290 = scmp.lt.s32.totalorder %s26, 1
        %s291 = scalar_select %p290, %s26, 1
        %s292 = smul.addr %s291, 3
        %s293 = scalar_lea.vmem %s2, %s292
        %p294 = pneg %p106
        %p295 = pneg %p103
        %p296 = pneg %p127
        %p297 = pneg %p124
        %p298 = pneg %p148
        %p299 = pneg %p145
        %p300 = pneg %p174
        %p301 = pneg %p171
        %s302 = smul.u32 4, %s25
        %s303 = ssub.s32 1, %s302
        %s304 = smul.u32 32, %s303
        %p305 = scmp.lt.s32.totalorder %s26, 1
        %s306 = scalar_select %p305, %s26, 1
        %s307 = smul.addr %s306, 3
        %s308 = scalar_lea.vmem %s2, %s307
        %s309 = smul.u32 4, %s25
        %s310 = ssub.s32 1, %s309
        %s311 = smul.u32 32, %s310
        %p313 = scmp.eq.s32.totalorder %s26, 0
        // Predicated region
        $region53: #{tpu_custom_call.1} parent=39 // pred_check
          %p314 = pneg %p313
        $region54: #{tpu_custom_call.1} parent=39 // pred_check_branch
          %316 = sbr.rel (%p314) target = $region56
        $region55: #{tpu_custom_call.1} parent=39 // pred_region
          %317 = vst [vmem:[#allocation2] sm:$0xff] 0.0
          %v318 = vld [vmem:[#allocation3] sm:$0xff]
          %vm319 = vcmask 130048
          %320 = vst.msk [vmem:[#allocation2] sm:$0xff] %vm319, %v318
        $region56: #{tpu_custom_call.1} parent=39 // pred_fallthru
          _
        %v321 = vld [vmem:[#allocation2] sm:$0xff]
        %v322 = vpack.c.bf16 %v321, %v321
        %v323 = vld [vmem:[%s272] sm:$0xff]
        %v324 = vld [vmem:[%s272 + $0x8] sm:$0xf]
        %v325 = vld [vmem:[%s272 + $0xc] sm:$0xff]
        %v326 = vld [vmem:[%s272 + $0x14] sm:$0xf]
        %v327 = vld [vmem:[%s272 + $0x18] sm:$0xff]
        %v328 = vld [vmem:[%s272 + $0x20] sm:$0xf]
        %v329 = vld [vmem:[%s272 + $0x24] sm:$0xff]
        %v330 = vld [vmem:[%s272 + $0x2c] sm:$0xf]
        %v331 = vld [vmem:[%s272 + $0x30] sm:$0xff]
        %v332 = vld [vmem:[%s272 + $0x38] sm:$0xf]
        %v333 = vld [vmem:[%s272 + $0x3c] sm:$0xff]
        %v334 = vld [vmem:[%s272 + $0x44] sm:$0xf]
        %v335 = vld [vmem:[%s272 + $0x48] sm:$0xff]
        %v336 = vld [vmem:[%s272 + $0x50] sm:$0xf]
        %v337 = vld [vmem:[%s272 + $0x54] sm:$0xff]
        %v338 = vld [vmem:[%s272 + $0x5c] sm:$0xf]
        %v339 = vld [vmem:[%s272 + $0x60] sm:$0xff]
        %v340 = vld [vmem:[%s272 + $0x68] sm:$0xf]
        %v341 = vld [vmem:[%s272 + $0x6c] sm:$0xff]
        %v342 = vld [vmem:[%s272 + $0x74] sm:$0xf]
        %v343 = vld [vmem:[%s272 + $0x78] sm:$0xff]
        %v344 = vld [vmem:[%s272 + $0x80] sm:$0xf]
        %v345 = vld [vmem:[%s272 + $0x84] sm:$0xff]
        %v346 = vld [vmem:[%s272 + $0x8c] sm:$0xf]
        %v347 = vld [vmem:[%s272 + $0x90] sm:$0xff]
        %v348 = vld [vmem:[%s272 + $0x98] sm:$0xf]
        %v349 = vld [vmem:[%s272 + $0x9c] sm:$0xff]
        %v350 = vld [vmem:[%s272 + $0xa4] sm:$0xf]
        %v351 = vld [vmem:[%s272 + $0xa8] sm:$0xff]
        %v352 = vld [vmem:[%s272 + $0xb0] sm:$0xf]
        %v353 = vld [vmem:[%s272 + $0xb4] sm:$0xff]
        %v354 = vld [vmem:[%s272 + $0xbc] sm:$0xf]
        %v355 = vld [vmem:[%s308] sm:$0x7]
        %v357 = vlaneseq
        %v358 = vshrl.u32 %v357, 7
        %v359 = vsub.s32 0, %v358
        %v360 = vrot.slane %v355, %v359
        %v361 = vlaneseq
        %v362 = vshrl.u32 %v361, 7
        %v363 = vsub.s32 1, %v362
        %v364 = vrot.slane %v355, %v363
        %v365 = vlaneseq
        %v366 = vshrl.u32 %v365, 7
        %v367 = vsub.s32 2, %v366
        %v368 = vrot.slane %v355, %v367
        %v404 = vunpack.c.l.b16 %v323
        %v405 = vunpack.c.h.b16 %v323
        %v406 = vunpack.c.l.b16 %v324
        %v407 = vunpack.c.l.b16 %v325
        %v408 = vunpack.c.h.b16 %v325
        %v409 = vunpack.c.l.b16 %v326
        %v410 = vunpack.c.l.b16 %v327
        %v411 = vunpack.c.h.b16 %v327
        %v412 = vunpack.c.l.b16 %v328
        %v413 = vunpack.c.l.b16 %v329
        %v414 = vunpack.c.h.b16 %v329
        %v415 = vunpack.c.l.b16 %v330
        %v416 = vunpack.c.l.b16 %v331
        %v417 = vunpack.c.h.b16 %v331
        %v418 = vunpack.c.l.b16 %v332
        %v419 = vunpack.c.l.b16 %v333
        %v420 = vunpack.c.h.b16 %v333
        %v421 = vunpack.c.l.b16 %v334
        %v422 = vunpack.c.l.b16 %v335
        %v423 = vunpack.c.h.b16 %v335
        %v424 = vunpack.c.l.b16 %v336
        %v425 = vunpack.c.l.b16 %v337
        %v426 = vunpack.c.h.b16 %v337
        %v427 = vunpack.c.l.b16 %v338
        %v428 = vunpack.c.l.b16 %v339
        %v429 = vunpack.c.h.b16 %v339
        %v430 = vunpack.c.l.b16 %v340
        %v431 = vunpack.c.l.b16 %v341
        %v432 = vunpack.c.h.b16 %v341
        %v433 = vunpack.c.l.b16 %v342
        %v434 = vunpack.c.l.b16 %v343
        %v435 = vunpack.c.h.b16 %v343
        %v436 = vunpack.c.l.b16 %v344
        %v437 = vunpack.c.l.b16 %v345
        %v438 = vunpack.c.h.b16 %v345
        %v439 = vunpack.c.l.b16 %v346
        %v440 = vunpack.c.l.b16 %v347
        %v441 = vunpack.c.h.b16 %v347
        %v442 = vunpack.c.l.b16 %v348
        %v443 = vunpack.c.l.b16 %v349
        %v444 = vunpack.c.h.b16 %v349
        %v445 = vunpack.c.l.b16 %v350
        %v446 = vunpack.c.l.b16 %v351
        %v447 = vunpack.c.h.b16 %v351
        %v448 = vunpack.c.l.b16 %v352
        %v449 = vunpack.c.l.b16 %v353
        %v450 = vunpack.c.h.b16 %v353
        %v451 = vunpack.c.l.b16 %v354
        %v452 = vpack.c.b16 %v407, %v404
        %v453 = vpack.c.b16 %v408, %v405
        %v454 = vpack.c.b16 %v409, %v406
        %v455 = vpack.c.b16 %v413, %v410
        %v456 = vpack.c.b16 %v414, %v411
        %v457 = vpack.c.b16 %v415, %v412
        %v458 = vpack.c.b16 %v419, %v416
        %v459 = vpack.c.b16 %v420, %v417
        %v460 = vpack.c.b16 %v421, %v418
        %v461 = vpack.c.b16 %v425, %v422
        %v462 = vpack.c.b16 %v426, %v423
        %v463 = vpack.c.b16 %v427, %v424
        %v464 = vpack.c.b16 %v431, %v428
        %v465 = vpack.c.b16 %v432, %v429
        %v466 = vpack.c.b16 %v433, %v430
        %v467 = vpack.c.b16 %v437, %v434
        %v468 = vpack.c.b16 %v438, %v435
        %v469 = vpack.c.b16 %v439, %v436
        %v470 = vpack.c.b16 %v443, %v440
        %v471 = vpack.c.b16 %v444, %v441
        %v472 = vpack.c.b16 %v445, %v442
        %v473 = vpack.c.b16 %v449, %v446
        %v474 = vpack.c.b16 %v450, %v447
        %v475 = vpack.c.b16 %v451, %v448
        %500 = vmatprep.subr.bf16.mxu0 %v453
        %501 = vmatpush1.bf16.msra.mxu0 %v452
        %502 = vmatprep.subr.bf16.mxu0 %v456
        %503 = vmatpush1.bf16.msra.mxu0 %v455
        %504 = vmatprep.subr.bf16.mxu0 %v459
        %505 = vmatpush1.bf16.msra.mxu0 %v458
        %506 = vmatprep.subr.bf16.mxu0 %v462
        %507 = vmatpush1.bf16.msra.mxu0 %v461
        %508 = vmatprep.subr.bf16.mxu0 %v465
        %509 = vmatpush1.bf16.msra.mxu0 %v464
        %510 = vmatprep.subr.bf16.mxu0 %v468
        %511 = vmatpush1.bf16.msra.mxu0 %v467
        %512 = vmatprep.subr.bf16.mxu0 %v471
        %513 = vmatpush1.bf16.msra.mxu0 %v470
        %514 = vmatprep.subr.bf16.mxu0 %v474
        %515 = vmatpush1.bf16.msra.mxu0 %v473
        %516 = vmatprep.subr.bf16.mxu0 0
        %517 = vmatpush1.bf16.msra.mxu0 0
        %518 = vmatprep.subr.bf16.mxu0 0
        %519 = vmatpush1.bf16.msra.mxu0 0
        %520 = vmatprep.subr.bf16.mxu0 0
        %521 = vmatpush1.bf16.msra.mxu0 0
        %522 = vmatprep.subr.bf16.mxu0 0
        %523 = vmatpush1.bf16.msra.mxu0 0
        %524 = vmatprep.subr.bf16.mxu0 0
        %525 = vmatpush1.bf16.msra.mxu0 0
        %526 = vmatprep.subr.bf16.mxu0 0
        %527 = vmatpush1.bf16.msra.mxu0 0
        %528 = vmatprep.subr.bf16.mxu0 0
        %529 = vmatpush1.bf16.msra.mxu0 0
        %530 = vmatprep.subr.bf16.mxu0 0
        %531 = vmatpush1.bf16.msra.mxu0 0
        %532 = vmatprep.mubr.bf16.mxu0 0
        %533 = vmatmul.mubr.bf16.gmra.mrb[0].mxu0 %v322
        %v534 = vpop.f32.mrb[0].mxu0
        %v535 = vadd.f32 %v360, %v534
        %v536 = vpop.f32.mrb[0].mxu0
        %v537 = vadd.f32 %v364, %v536
        %v538 = vpop.f32.mrb[0].mxu0
        %v539 = vpop.f32.mrb[0].mxu0
        %540 = vdwg.mxu0
        %541 = vmatprep.subr.bf16.mxu0 0
        %542 = vmatpush1.bf16.msra.mxu0 %v454
        %543 = vmatprep.subr.bf16.mxu0 0
        %544 = vmatpush1.bf16.msra.mxu0 %v457
        %545 = vmatprep.subr.bf16.mxu0 0
        %546 = vmatpush1.bf16.msra.mxu0 %v460
        %547 = vmatprep.subr.bf16.mxu0 0
        %548 = vmatpush1.bf16.msra.mxu0 %v463
        %549 = vmatprep.subr.bf16.mxu0 0
        %550 = vmatpush1.bf16.msra.mxu0 %v466
        %551 = vmatprep.subr.bf16.mxu0 0
        %552 = vmatpush1.bf16.msra.mxu0 %v469
        %553 = vmatprep.subr.bf16.mxu0 0
        %554 = vmatpush1.bf16.msra.mxu0 %v472
        %555 = vmatprep.subr.bf16.mxu0 0
        %556 = vmatpush1.bf16.msra.mxu0 %v475
        %557 = vmatprep.subr.bf16.mxu0 0
        %558 = vmatpush1.bf16.msra.mxu0 0
        %559 = vmatprep.subr.bf16.mxu0 0
        %560 = vmatpush1.bf16.msra.mxu0 0
        %561 = vmatprep.subr.bf16.mxu0 0
        %562 = vmatpush1.bf16.msra.mxu0 0
        %563 = vmatprep.subr.bf16.mxu0 0
        %564 = vmatpush1.bf16.msra.mxu0 0
        %565 = vmatprep.subr.bf16.mxu0 0
        %566 = vmatpush1.bf16.msra.mxu0 0
        %567 = vmatprep.subr.bf16.mxu0 0
        %568 = vmatpush1.bf16.msra.mxu0 0
        %569 = vmatprep.subr.bf16.mxu0 0
        %570 = vmatpush1.bf16.msra.mxu0 0
        %571 = vmatprep.subr.bf16.mxu0 0
        %572 = vmatpush1.bf16.msra.mxu0 0
        %573 = vmatprep.mubr.bf16.mxu0 0
        %574 = vmatmul.mubr.bf16.gmra.mrb[0].mxu0 %v322
        %v575 = vpop.f32.mrb[0].mxu0
        %v576 = vadd.f32 %v368, %v575
        %v577 = vpop.f32.mrb[0].mxu0
        %v578 = vpop.f32.mrb[0].mxu0
        %v579 = vpop.f32.mrb[0].mxu0
        %580 = vdwg.mxu0
        %v581 = vmul.f32 %v535, 0.5
        %v582 = vtanh.pop %v581
        %v583 = vadd.f32 %v582, 1.0
        %v584 = vmul.f32 %v583, 0.5
        %v585 = vtanh.pop %v537
        %v586 = vmul.f32 %v576, 0.5
        %v587 = vtanh.pop %v586
        %v588 = vadd.f32 %v587, 1.0
        %v589 = vmul.f32 %v588, 0.5
        %v590 = vmul.f32 %v584, %v585
        %v591 = vtanh.pop %v590
        %v592 = vmul.f32 %v589, %v591
        %593 = vst [vmem:[#allocation2] sm:$0xff] %v592
        %p594 = scmp.eq.s32.totalorder %s26, 1
        // Predicated region
        $region57: #{tpu_custom_call.1} parent=39 // pred_check
          %p595 = pneg %p594
        $region58: #{tpu_custom_call.1} parent=39 // pred_check_branch
          %597 = sbr.rel (%p595) target = $region60
        $region59: #{tpu_custom_call.1} parent=39 // pred_region
          %v598 = vpack.c.bf16 %v592, %v592
          %v599 = vld [vmem:[#allocation8] sm:$0xf]
          %v600 = vld [vmem:[#allocation8 + $0x4] sm:$0xf]
          %v601 = vld [vmem:[#allocation8 + $0x8] sm:$0xf]
          %v602 = vld [vmem:[#allocation8 + $0xc] sm:$0xf]
          %v603 = vld [vmem:[#allocation8 + $0x10] sm:$0xf]
          %v604 = vld [vmem:[#allocation8 + $0x14] sm:$0xf]
          %v605 = vld [vmem:[#allocation8 + $0x18] sm:$0xf]
          %v606 = vld [vmem:[#allocation8 + $0x1c] sm:$0xf]
          %v607 = vld [vmem:[#allocation8 + $0x20] sm:$0xf]
          %v608 = vld [vmem:[#allocation8 + $0x24] sm:$0xf]
          %v609 = vld [vmem:[#allocation8 + $0x28] sm:$0xf]
          %v610 = vld [vmem:[#allocation8 + $0x2c] sm:$0xf]
          %v611 = vld [vmem:[#allocation8 + $0x30] sm:$0xf]
          %v612 = vld [vmem:[#allocation8 + $0x34] sm:$0xf]
          %v613 = vld [vmem:[#allocation8 + $0x38] sm:$0xf]
          %v614 = vld [vmem:[#allocation8 + $0x3c] sm:$0xf]
          %v615 = vld [vmem:[%s4] sm:$0x1]
          %v617 = vlaneseq
          %v618 = vshrl.u32 %v617, 7
          %v619 = vsub.s32 0, %v618
          %v620 = vrot.slane %v615, %v619
          %v638 = vunpack.c.l.b16 %v599
          %v639 = vunpack.c.l.b16 %v600
          %v640 = vunpack.c.l.b16 %v601
          %v641 = vunpack.c.l.b16 %v602
          %v642 = vunpack.c.l.b16 %v603
          %v643 = vunpack.c.l.b16 %v604
          %v644 = vunpack.c.l.b16 %v605
          %v645 = vunpack.c.l.b16 %v606
          %v646 = vunpack.c.l.b16 %v607
          %v647 = vunpack.c.l.b16 %v608
          %v648 = vunpack.c.l.b16 %v609
          %v649 = vunpack.c.l.b16 %v610
          %v650 = vunpack.c.l.b16 %v611
          %v651 = vunpack.c.l.b16 %v612
          %v652 = vunpack.c.l.b16 %v613
          %v653 = vunpack.c.l.b16 %v614
          %v654 = vpack.c.b16 %v639, %v638
          %v655 = vpack.c.b16 %v641, %v640
          %v656 = vpack.c.b16 %v643, %v642
          %v657 = vpack.c.b16 %v645, %v644
          %v658 = vpack.c.b16 %v647, %v646
          %v659 = vpack.c.b16 %v649, %v648
          %v660 = vpack.c.b16 %v651, %v650
          %v661 = vpack.c.b16 %v653, %v652
          %670 = vmatprep.subr.bf16.mxu0 0
          %671 = vmatpush1.bf16.msra.mxu0 %v654
          %672 = vmatprep.subr.bf16.mxu0 0
          %673 = vmatpush1.bf16.msra.mxu0 %v655
          %674 = vmatprep.subr.bf16.mxu0 0
          %675 = vmatpush1.bf16.msra.mxu0 %v656
          %676 = vmatprep.subr.bf16.mxu0 0
          %677 = vmatpush1.bf16.msra.mxu0 %v657
          %678 = vmatprep.subr.bf16.mxu0 0
          %679 = vmatpush1.bf16.msra.mxu0 %v658
          %680 = vmatprep.subr.bf16.mxu0 0
          %681 = vmatpush1.bf16.msra.mxu0 %v659
          %682 = vmatprep.subr.bf16.mxu0 0
          %683 = vmatpush1.bf16.msra.mxu0 %v660
          %684 = vmatprep.subr.bf16.mxu0 0
          %685 = vmatpush1.bf16.msra.mxu0 %v661
          %686 = vmatprep.subr.bf16.mxu0 0
          %687 = vmatpush1.bf16.msra.mxu0 0
          %688 = vmatprep.subr.bf16.mxu0 0
          %689 = vmatpush1.bf16.msra.mxu0 0
          %690 = vmatprep.subr.bf16.mxu0 0
          %691 = vmatpush1.bf16.msra.mxu0 0
          %692 = vmatprep.subr.bf16.mxu0 0
          %693 = vmatpush1.bf16.msra.mxu0 0
          %694 = vmatprep.subr.bf16.mxu0 0
          %695 = vmatpush1.bf16.msra.mxu0 0
          %696 = vmatprep.subr.bf16.mxu0 0
          %697 = vmatpush1.bf16.msra.mxu0 0
          %698 = vmatprep.subr.bf16.mxu0 0
          %699 = vmatpush1.bf16.msra.mxu0 0
          %700 = vmatprep.subr.bf16.mxu0 0
          %701 = vmatpush1.bf16.msra.mxu0 0
          %702 = vmatprep.mubr.bf16.mxu0 0
          %703 = vmatmul.mubr.bf16.gmra.mrb[0].mxu0 %v598
          %v704 = vpop.f32.mrb[0].mxu0
          %v705 = vadd.f32 %v620, %v704
          %v706 = vpop.f32.mrb[0].mxu0
          %v707 = vpop.f32.mrb[0].mxu0
          %v708 = vpop.f32.mrb[0].mxu0
          %709 = vdwg.mxu0
          %710 = vst [vmem:[#allocation9] sm:$0xff] %v705
        $region60: #{tpu_custom_call.1} parent=39 // pred_fallthru
          _
        // Predicated region
        $region61: #{tpu_custom_call.1} parent=39 // pred_check
          %p711 = pneg %p171
        $region62: #{tpu_custom_call.1} parent=39 // pred_check_branch
          %713 = sbr.rel (%p711) target = $region64
        $region63: #{tpu_custom_call.1} parent=39 // pred_region
          %s714 = smul.u32 4, %s25
          %s715 = ssub.s32 1, %s714
          %s716 = smul.u32 32, %s715
          %s718 = ssub.s32 128, %s716
          %719 = vsyncadd [#allocation5], %s718
          %p720 = scmp.ne.s32.totalorder 0, %s716
          %s721 = smul.addr %s714, 32
          %s722 = scalar_lea.hbm %s5, %s721
          %s723 = smul.u32 2, %s715
          %s724 = sshll.u32 [#allocation9], 4
          %s725 = int_to_ptr.vmem [resolvable:$true] %s724
          %s726 = sshll.u32 %s723, 4
          %730 = dma.vmem_to_hbm [thread:$0]  (%p720), %s725, %s726, %s722, [#allocation5], 32, 32, 2
        $region64: #{tpu_custom_call.1} parent=39 // pred_fallthru
          _
        // Predicated region
        $region65: #{tpu_custom_call.1} parent=39 // pred_check
          %p731 = pneg %p171
        $region66: #{tpu_custom_call.1} parent=39 // pred_check_branch
          %733 = sbr.rel (%p731) target = $region68
        $region67: #{tpu_custom_call.1} parent=39 // pred_region
          %734 = dma.done [#allocation5], 128
        $region68: #{tpu_custom_call.1} parent=39 // pred_fallthru
          _
      $region40: #{tpu_custom_call.1} parent=5 // pred_fallthru
        _
      %p735 = scmp.le.s32.totalorder 2, %s16
      // Predicated region
      $region69: #{tpu_custom_call.1} parent=5 // pred_check
        %p736 = pneg %p735
      $region70: #{tpu_custom_call.1} parent=5 // pred_check_branch
        %738 = sbr.rel (%p736) target = $region72
      $region71: #{tpu_custom_call.1} parent=5 // pred_region
        %s739 = ssub.s32 %s16, 2
      $region72: #{tpu_custom_call.1} parent=5 // pred_fallthru
        _
    $region6: #{tpu_custom_call.1} parent=1 // loop_footer
      %s20 = sadd.s32 1, %s16
    $region7: #{tpu_custom_call.1} parent=1 // loop_footer_branch
      %15 = sbr.rel target = $region3
    $region8: #{tpu_custom_call.1} parent=1 // loop_exit
      _
    %740 = vsyncpa [#allocation4], 1
    %s741 = scalar_lea.sflag [#allocation4], 1
    %742 = vsyncpa %s741, 1
    %743 = vsyncpa [#allocation7], 1
    %s744 = scalar_lea.sflag [#allocation7], 1
    %745 = vsyncpa %s744, 1
    %746 = vsyncpa [#allocation5], 1
    %s747 = scalar_lea.sflag [#allocation5], 1
    %748 = vsyncpa %s747, 1

</llo_original>
